<compile_context>
chip_gen: v7x
topology: tpu7x:2x2x1
jax: 0.10.0
libtpu: 0.0.40
codegen_flags: <defaults>
</compile_context>

<pallas_src>
import jax
import jax.numpy as jnp
from jax.experimental import pallas as pl
from jax.experimental.pallas import tpu as pltpu


def rnn_seq_kernel(x_ref, h0_ref, w_ih_ref, w_hh_ref, b_ih_ref,
                   w_ho_ref, b_ho_ref, out_ref, hid_ref):
    """One grid step == one RNN timestep. hid_ref is the VMEM-resident carry."""
    t = pl.program_id(0)

    @pl.when(t == 0)
    def _():
        hid_ref[...] = h0_ref[...]

    x_t = x_ref[0, :, :]        # (B, input_size)
    h_prev = hid_ref[...]       # (B, hidden_size)

    # hidden = i2h(cat(x, h)) == x @ W_ih + h @ W_hh + b_ih   (concat eliminated)
    hidden = (jnp.dot(x_t, w_ih_ref[...], preferred_element_type=jnp.float32)
              + jnp.dot(h_prev, w_hh_ref[...], preferred_element_type=jnp.float32)
              + b_ih_ref[...])

    # output = h2o(hidden)
    logits = jnp.dot(hidden, w_ho_ref[...],
                     preferred_element_type=jnp.float32) + b_ho_ref[...]

    # log_softmax(dim=1), numerically stable.
    m = jnp.max(logits, axis=1, keepdims=True)
    shifted = logits - m
    lse = jnp.log(jnp.sum(jnp.exp(shifted), axis=1, keepdims=True))

    out_ref[0, :, :] = (shifted - lse).astype(out_ref.dtype)
    hid_ref[...] = hidden.astype(hid_ref.dtype)


def _pad_batch(a, axis, mult=8):
    pad = (-a.shape[axis]) % mult
    if pad == 0:
        return a
    widths = [(0, 0)] * a.ndim
    widths[axis] = (0, pad)
    return jnp.pad(a, widths)


def rnn_forward_sequence(x_seq, h0, w_ih, w_hh, b_ih, w_ho, b_ho):
    """Run the RNN cell over a whole sequence in one kernel.

    x_seq: (T, B, input_size)          h0: (B, hidden_size)
    w_ih:  (input_size, hidden_size)   w_hh: (hidden_size, hidden_size)
    b_ih:  (1, hidden_size)            w_ho: (hidden_size, output_size)
    b_ho:  (1, output_size)
    Returns (log-softmax outputs (T, B, output_size), final hidden (B, hidden_size)).
    """
    T, B, input_size = x_seq.shape
    hidden_size = w_hh.shape[0]
    output_size = w_ho.shape[1]

    # Pad the batch (sublane) dimension to a multiple of 8.
    xp = _pad_batch(x_seq, axis=1)
    hp = _pad_batch(h0, axis=0)
    Bp = xp.shape[1]

    const2 = lambda t: (0, 0)   # weights / biases / carry: resident across time

    out, hid = pl.pallas_call(
        rnn_seq_kernel,
        out_shape=(
            jax.ShapeDtypeStruct((T, Bp, output_size), jnp.float32),
            jax.ShapeDtypeStruct((Bp, hidden_size), jnp.float32),
        ),
        grid=(T,),
        in_specs=[
            pl.BlockSpec((1, Bp, input_size), lambda t: (t, 0, 0)),   # x_t
            pl.BlockSpec((Bp, hidden_size), const2),                  # h0
            pl.BlockSpec((input_size, hidden_size), const2),          # W_ih
            pl.BlockSpec((hidden_size, hidden_size), const2),         # W_hh
            pl.BlockSpec((1, hidden_size), const2),                   # b_ih
            pl.BlockSpec((hidden_size, output_size), const2),         # W_ho
            pl.BlockSpec((1, output_size), const2),                   # b_ho
        ],
        out_specs=(
            pl.BlockSpec((1, Bp, output_size), lambda t: (t, 0, 0)),  # per-step output
            pl.BlockSpec((Bp, hidden_size), const2),                  # carried hidden
        ),
        compiler_params=pltpu.CompilerParams(
            # Recurrence over time must be sequential -> "arbitrary", never "parallel".
            dimension_semantics=("arbitrary",),
        ),
    )(xp, hp, w_ih, w_hh, b_ih, w_ho, b_ho)

    return out[:, :B, :], hid[:B, :]


def rnn_forward(x, h, w_ih, w_hh, b_ih, w_ho, b_ho):
    """Single-step forward matching the PyTorch module's forward(input, hidden)."""
    out, hid = rnn_forward_sequence(x[None], h, w_ih, w_hh, b_ih, w_ho, b_ho)
    return out[0], hid


def reference_sequence(x_seq, h0, w_i2h, b_i2h, w_h2o, b_h2o):
    """Pure-JAX reference using the original cat + single i2h formulation."""
    h = h0
    outs = []
    for t in range(x_seq.shape[0]):
        combined = jnp.concatenate([x_seq[t], h], axis=1)
        h = combined @ w_i2h + b_i2h
        logits = h @ w_h2o + b_h2o
        outs.append(jax.nn.log_softmax(logits, axis=1))
    return jnp.stack(outs, axis=0), h


if __name__ == "__main__":
    batch = 2
    input_size = 16
    hidden_size = 32
    output_size = 8
    seq_len = 8

    key = jax.random.PRNGKey(0)
    kx, kw1, kb1, kw2, kb2 = jax.random.split(key, 5)

    x_seq = jax.random.normal(kx, (seq_len, batch, input_size), dtype=jnp.float32)
    h0 = jnp.zeros((batch, hidden_size), dtype=jnp.float32)   # initHidden() analogue

    # PyTorch-Linear-style init on the combined i2h weight, then split for the kernel.
    bound1 = 1.0 / jnp.sqrt(input_size + hidden_size)
    w_i2h = jax.random.uniform(kw1, (input_size + hidden_size, hidden_size),
                               minval=-bound1, maxval=bound1, dtype=jnp.float32)
    b_i2h = jax.random.uniform(kb1, (1, hidden_size),
                               minval=-bound1, maxval=bound1, dtype=jnp.float32)
    w_ih = w_i2h[:input_size, :]        # (input_size, hidden_size)
    w_hh = w_i2h[input_size:, :]        # (hidden_size, hidden_size)

    bound2 = 1.0 / jnp.sqrt(hidden_size)
    w_h2o = jax.random.uniform(kw2, (hidden_size, output_size),
                               minval=-bound2, maxval=bound2, dtype=jnp.float32)
    b_h2o = jax.random.uniform(kb2, (1, output_size),
                               minval=-bound2, maxval=bound2, dtype=jnp.float32)

    # Fused-sequence kernel (one pallas_call for all timesteps).
    out_seq, hid_final = rnn_forward_sequence(x_seq, h0, w_ih, w_hh, b_i2h, w_h2o, b_h2o)
    jax.block_until_ready((out_seq, hid_final))

    # Single-step API (matches the module's forward signature).
    out1, hid1 = rnn_forward(x_seq[0], h0, w_ih, w_hh, b_i2h, w_h2o, b_h2o)
    jax.block_until_ready((out1, hid1))

    # Validate against a pure-JAX reference of the original module semantics.
    ref_seq, ref_hid = reference_sequence(x_seq, h0, w_i2h, b_i2h, w_h2o, b_h2o)
    assert jnp.allclose(out_seq, ref_seq, atol=1e-5, rtol=1e-5)
    assert jnp.allclose(hid_final, ref_hid, atol=1e-5, rtol=1e-5)
    assert jnp.allclose(out1, ref_seq[0], atol=1e-5, rtol=1e-5)
    assert jnp.allclose(hid1, jnp.concatenate([x_seq[0], h0], 1) @ w_i2h + b_i2h,
                        atol=1e-5, rtol=1e-5)

    print("KERNEL_OK")
</pallas_src>

<mosaic_0001>
module attributes {stable_mosaic.version = 11 : i64} {
  func.func @rnn_seq_kernel(%arg0: i32, %arg1: memref<1x8x16xf32, #tpu.memory_space<vmem>>, %arg2: memref<8x32xf32, #tpu.memory_space<vmem>>, %arg3: memref<16x32xf32, #tpu.memory_space<vmem>>, %arg4: memref<32x32xf32, #tpu.memory_space<vmem>>, %arg5: memref<1x32xf32, #tpu.memory_space<vmem>>, %arg6: memref<32x8xf32, #tpu.memory_space<vmem>>, %arg7: memref<1x8xf32, #tpu.memory_space<vmem>>, %arg8: memref<1x8x8xf32, #tpu.memory_space<vmem>>, %arg9: memref<8x32xf32, #tpu.memory_space<vmem>>) attributes {dimension_semantics = [#tpu.dimension_semantics<arbitrary>], iteration_bounds = array<i64: 8>, scalar_prefetch = 0 : i64, scratch_operands = 0 : i64, tpu.core_type = #tpu.core_type<tc>, window_params = [{transform_indices = @transform_0, window_bounds = array<i64: 1, 8, 16>}, {pipeline_mode = #tpu.pipeline_mode<synchronous>, transform_indices = @transform_1, window_bounds = array<i64: 8, 32>}, {pipeline_mode = #tpu.pipeline_mode<synchronous>, transform_indices = @transform_2, window_bounds = array<i64: 16, 32>}, {pipeline_mode = #tpu.pipeline_mode<synchronous>, transform_indices = @transform_3, window_bounds = array<i64: 32, 32>}, {pipeline_mode = #tpu.pipeline_mode<synchronous>, transform_indices = @transform_4, window_bounds = array<i64: 1, 32>}, {pipeline_mode = #tpu.pipeline_mode<synchronous>, transform_indices = @transform_5, window_bounds = array<i64: 32, 8>}, {pipeline_mode = #tpu.pipeline_mode<synchronous>, transform_indices = @transform_6, window_bounds = array<i64: 1, 8>}, {transform_indices = @transform_7, window_bounds = array<i64: 1, 8, 8>}, {pipeline_mode = #tpu.pipeline_mode<synchronous>, transform_indices = @transform_8, window_bounds = array<i64: 8, 32>}]} {
    %c0_i32 = arith.constant 0 : i32
    %0 = arith.cmpi eq, %arg0, %c0_i32 : i32
    %1 = arith.extui %0 : i1 to i32
    %c0_i32_0 = arith.constant 0 : i32
    %2 = arith.cmpi ne, %1, %c0_i32_0 : i32
    scf.if %2 {
      %c0_24 = arith.constant 0 : index
      %c0_25 = arith.constant 0 : index
      %33 = vector.load %arg2[%c0_24, %c0_25] : memref<8x32xf32, #tpu.memory_space<vmem>>, vector<8x32xf32>
      %c0_26 = arith.constant 0 : index
      %c0_27 = arith.constant 0 : index
      %34 = vector.load %arg9[%c0_26, %c0_27] : memref<8x32xf32, #tpu.memory_space<vmem>>, vector<8x32xf32>
      tpu.vector_store %arg9[%c0_26, %c0_27], %33 {strides = array<i32>} : memref<8x32xf32, #tpu.memory_space<vmem>>, vector<8x32xf32>,
    } else {
    }
    %c0 = arith.constant 0 : index
    %c0_1 = arith.constant 0 : index
    %c0_2 = arith.constant 0 : index
    %3 = vector.load %arg1[%c0, %c0_1, %c0_2] : memref<1x8x16xf32, #tpu.memory_space<vmem>>, vector<1x8x16xf32>
    %4 = vector.shape_cast %3 : vector<1x8x16xf32> to vector<8x16xf32>
    %c0_3 = arith.constant 0 : index
    %c0_4 = arith.constant 0 : index
    %5 = vector.load %arg9[%c0_3, %c0_4] : memref<8x32xf32, #tpu.memory_space<vmem>>, vector<8x32xf32>
    %c0_5 = arith.constant 0 : index
    %c0_6 = arith.constant 0 : index
    %6 = vector.load %arg3[%c0_5, %c0_6] : memref<16x32xf32, #tpu.memory_space<vmem>>, vector<16x32xf32>
    %cst = arith.constant dense<0.000000e+00> : vector<8x32xf32>
    %7 = tpu.matmul %4, %6, %cst {dimension_numbers = #tpu.dot_dimension_numbers<[1], [0], [0], [1], [0, 0, 1, 1], [], []>} : vector<8x16xf32>, vector<16x32xf32>, vector<8x32xf32> -> vector<8x32xf32>
    %c0_7 = arith.constant 0 : index
    %c0_8 = arith.constant 0 : index
    %8 = vector.load %arg4[%c0_7, %c0_8] : memref<32x32xf32, #tpu.memory_space<vmem>>, vector<32x32xf32>
    %cst_9 = arith.constant dense<0.000000e+00> : vector<8x32xf32>
    %9 = tpu.matmul %5, %8, %cst_9 {dimension_numbers = #tpu.dot_dimension_numbers<[1], [0], [0], [1], [0, 0, 1, 1], [], []>} : vector<8x32xf32>, vector<32x32xf32>, vector<8x32xf32> -> vector<8x32xf32>
    %10 = arith.addf %7, %9 : vector<8x32xf32>
    %c0_10 = arith.constant 0 : index
    %c0_11 = arith.constant 0 : index
    %11 = vector.load %arg5[%c0_10, %c0_11] : memref<1x32xf32, #tpu.memory_space<vmem>>, vector<1x32xf32>
    %12 = vector.broadcast %11 : vector<1x32xf32> to vector<8x32xf32>
    %13 = arith.addf %10, %12 : vector<8x32xf32>
    %c0_12 = arith.constant 0 : index
    %c0_13 = arith.constant 0 : index
    %14 = vector.load %arg6[%c0_12, %c0_13] : memref<32x8xf32, #tpu.memory_space<vmem>>, vector<32x8xf32>
    %cst_14 = arith.constant dense<0.000000e+00> : vector<8x8xf32>
    %15 = tpu.matmul %13, %14, %cst_14 {dimension_numbers = #tpu.dot_dimension_numbers<[1], [0], [0], [1], [0, 0, 1, 1], [], []>} : vector<8x32xf32>, vector<32x8xf32>, vector<8x8xf32> -> vector<8x8xf32>
    %c0_15 = arith.constant 0 : index
    %c0_16 = arith.constant 0 : index
    %16 = vector.load %arg7[%c0_15, %c0_16] : memref<1x8xf32, #tpu.memory_space<vmem>>, vector<1x8xf32>
    %17 = vector.broadcast %16 : vector<1x8xf32> to vector<8x8xf32>
    %18 = arith.addf %15, %17 : vector<8x8xf32>
    %cst_17 = arith.constant dense<0xFF800000> : vector<8xf32>
    %19 = vector.multi_reduction <maximumf>, %18, %cst_17 [1] : vector<8x8xf32> to vector<8xf32>
    %20 = vector.shape_cast %19 : vector<8xf32> to vector<8x1xf32>
    %21 = vector.broadcast %20 : vector<8x1xf32> to vector<8x8xf32>
    %22 = arith.subf %18, %21 : vector<8x8xf32>
    %23 = math.exp %22 : vector<8x8xf32>
    %cst_18 = arith.constant dense<0.000000e+00> : vector<8xf32>
    %24 = vector.multi_reduction <add>, %23, %cst_18 [1] : vector<8x8xf32> to vector<8xf32>
    %25 = vector.shape_cast %24 : vector<8xf32> to vector<8x1xf32>
    %26 = math.log %25 : vector<8x1xf32>
    %27 = vector.broadcast %26 : vector<8x1xf32> to vector<8x8xf32>
    %28 = arith.subf %22, %27 : vector<8x8xf32>
    %c0_19 = arith.constant 0 : index
    %c0_20 = arith.constant 0 : index
    %c0_21 = arith.constant 0 : index
    %29 = vector.load %arg8[%c0_19, %c0_20, %c0_21] : memref<1x8x8xf32, #tpu.memory_space<vmem>>, vector<1x8x8xf32>
    %30 = vector.shape_cast %29 : vector<1x8x8xf32> to vector<8x8xf32>
    %31 = vector.shape_cast %28 : vector<8x8xf32> to vector<1x8x8xf32>
    tpu.vector_store %arg8[%c0_19, %c0_20, %c0_21], %31 {strides = array<i32>} : memref<1x8x8xf32, #tpu.memory_space<vmem>>, vector<1x8x8xf32>,
    %c0_22 = arith.constant 0 : index
    %c0_23 = arith.constant 0 : index
    %32 = vector.load %arg9[%c0_22, %c0_23] : memref<8x32xf32, #tpu.memory_space<vmem>>, vector<8x32xf32>
    tpu.vector_store %arg9[%c0_22, %c0_23], %13 {strides = array<i32>} : memref<8x32xf32, #tpu.memory_space<vmem>>, vector<8x32xf32>,
    return
  }
  func.func @transform_0(%arg0: i32) -> (i32, i32, i32) {
    %c0_i32 = arith.constant 0 : i32
    %c0_i32_0 = arith.constant 0 : i32
    %c0_i32_1 = arith.constant 0 : i32
    return %arg0, %c0_i32, %c0_i32_0 : i32, i32, i32
  }
  func.func @transform_1(%arg0: i32) -> (i32, i32) {
    %c0_i32 = arith.constant 0 : i32
    %c0_i32_0 = arith.constant 0 : i32
    %c0_i32_1 = arith.constant 0 : i32
    return %c0_i32, %c0_i32_0 : i32, i32
  }
  func.func @transform_2(%arg0: i32) -> (i32, i32) {
    %c0_i32 = arith.constant 0 : i32
    %c0_i32_0 = arith.constant 0 : i32
    %c0_i32_1 = arith.constant 0 : i32
    return %c0_i32, %c0_i32_0 : i32, i32
  }
  func.func @transform_3(%arg0: i32) -> (i32, i32) {
    %c0_i32 = arith.constant 0 : i32
    %c0_i32_0 = arith.constant 0 : i32
    %c0_i32_1 = arith.constant 0 : i32
    return %c0_i32, %c0_i32_0 : i32, i32
  }
  func.func @transform_4(%arg0: i32) -> (i32, i32) {
    %c0_i32 = arith.constant 0 : i32
    %c0_i32_0 = arith.constant 0 : i32
    %c0_i32_1 = arith.constant 0 : i32
    return %c0_i32, %c0_i32_0 : i32, i32
  }
  func.func @transform_5(%arg0: i32) -> (i32, i32) {
    %c0_i32 = arith.constant 0 : i32
    %c0_i32_0 = arith.constant 0 : i32
    %c0_i32_1 = arith.constant 0 : i32
    return %c0_i32, %c0_i32_0 : i32, i32
  }
  func.func @transform_6(%arg0: i32) -> (i32, i32) {
    %c0_i32 = arith.constant 0 : i32
    %c0_i32_0 = arith.constant 0 : i32
    %c0_i32_1 = arith.constant 0 : i32
    return %c0_i32, %c0_i32_0 : i32, i32
  }
  func.func @transform_7(%arg0: i32) -> (i32, i32, i32) {
    %c0_i32 = arith.constant 0 : i32
    %c0_i32_0 = arith.constant 0 : i32
    %c0_i32_1 = arith.constant 0 : i32
    return %arg0, %c0_i32, %c0_i32_0 : i32, i32, i32
  }
  func.func @transform_8(%arg0: i32) -> (i32, i32) {
    %c0_i32 = arith.constant 0 : i32
    %c0_i32_0 = arith.constant 0 : i32
    %c0_i32_1 = arith.constant 0 : i32
    return %c0_i32, %c0_i32_0 : i32, i32
  }
}

</mosaic_0001>

<llo_original>
// kernel: tpu_custom_call.1
$region0: #{tpu_custom_call.1}
  #allocation0 [shape = 'u32[]', space=smem, size = 0x4, offset = 0x4, fixed_abs, tag = 'smem constant byte address 0x4 - core index']
  #allocation1 [shape = 'u32[144,128]{1,0:T(1,128)}', space=vmem, size = 0x12000, scoped, tag = 'internal scratch']
  %s0 = inlined_call_operand.hbm [shape: f32[8,8,16], index: 0, kind: input, shape index: {}]
  %s1 = inlined_call_operand.hbm [shape: f32[8,32], index: 1, kind: input, shape index: {}]
  %s2 = inlined_call_operand.vmem [shape: f32[16,32], index: 2, kind: input, shape index: {}]
  %s3 = inlined_call_operand.vmem [shape: f32[32,32], index: 3, kind: input, shape index: {}]
  %s4 = inlined_call_operand.vmem [shape: f32[1,32], index: 4, kind: input, shape index: {}]
  %s5 = inlined_call_operand.vmem [shape: f32[32,8], index: 5, kind: input, shape index: {}]
  %s6 = inlined_call_operand.vmem [shape: f32[1,8], index: 6, kind: input, shape index: {}]
  %s7 = inlined_call_operand.hbm [shape: f32[8,8,8], index: 7, kind: output, shape index: {0}]
  %s8 = inlined_call_operand.hbm [shape: f32[8,32], index: 8, kind: output, shape index: {1}]
  %9 = xla_tuple %s7, %s8
  %s10 = sld [smem:[#allocation0]]
  $region81: #{tpu_custom_call.1} parent=0
    _
  %s12 = ssub.s32 1, %s10
  %s13 = scalar_select 0, %s12, %s10
  $region1: #{tpu_custom_call.1} parent=0
    #allocation2 [shape = 'u8[8192]{0}', space=vmem, size = 0x2000, scoped, tag = 'input window, operand 0']
    #allocation3 [shape = 's32[2]{0}', space=sflag, size = 0x8, scoped, tag = 'scoped memory for tpu_custom_call.1']
    #allocation4 [shape = 's32[2]{0}', space=sflag, size = 0x8, scoped, tag = 'scoped memory for tpu_custom_call.1']
    #allocation5 [shape = 'u8[4096]{0}', space=vmem, size = 0x1000, scoped, tag = 'input window, operand 1, single buffered']
    #allocation6 [shape = 's32[1]{0}', space=sflag, size = 0x4, scoped, tag = 'scoped memory for tpu_custom_call.1']
    #allocation7 [shape = 'u8[8192]{0}', space=vmem, size = 0x2000, scoped, tag = 'output window, operand 0']
    #allocation8 [shape = 'u8[4096]{0}', space=vmem, size = 0x1000, scoped, tag = 'output window, operand 1, single buffered']
    #allocation9 [shape = 's32[1]{0}', space=sflag, size = 0x4, scoped, tag = 'scoped memory for tpu_custom_call.1']
    %14 = vsyncpa [#allocation3], 0
    %s15 = scalar_lea.sflag [#allocation3], 1
    %16 = vsyncpa %s15, 0
    %17 = vsyncpa [#allocation6], 0
    %18 = vsyncpa [#allocation4], 0
    %s19 = scalar_lea.sflag [#allocation4], 1
    %20 = vsyncpa %s19, 0
    %21 = vsyncpa [#allocation9], 0
    loop: start=0, step=1, limit=10
    $region2: #{tpu_custom_call.1} parent=1 // loop_pre_header
      _
    $region3: #{tpu_custom_call.1} parent=1 // loop_header
      %s23 = sphi 0, %s27
      %p24 = scmp.ge.s32.totalorder %s23, 10
      %s33 = sphi 0, %s35
      %s36 = sphi 0, %s33
      %s37 = sphi 0, %s36
      %s53 = sphi 0, %s37
      %s57 = sphi 0, %s57
      %s59 = sphi 0, %s57
      %s60 = sphi 0, %s59
      %s74 = sphi 0, %s60
      %s78 = sphi 0, %s78
      %s80 = sphi 0, %s78
      %s81 = sphi 0, %s80
      %s95 = sphi 0, %s81
      %s99 = sphi 0, %s99
      %s101 = sphi 0, %s99
      %s102 = sphi 0, %s101
      %s116 = sphi 0, %s102
      %s120 = sphi 0, %s120
      %s122 = sphi 0, %s120
      %s123 = sphi 0, %s122
      %s137 = sphi 0, %s123
      %s141 = sphi 0, %s141
      %s143 = sphi 0, %s141
      %s144 = sphi 0, %s143
      %s158 = sphi 0, %s144
      %s162 = sphi 0, %s162
      %s164 = sphi 0, %s162
      %s165 = sphi 0, %s164
      %s179 = sphi 0, %s165
      %s185 = sphi 0, %s187
      %s188 = sphi 0, %s185
      %s189 = sphi 0, %s188
      %s205 = sphi 0, %s189
      %s209 = sphi 0, %s209
      %s211 = sphi 0, %s209
      %s212 = sphi 0, %s211
      %s226 = sphi 0, %s212
    $region4: #{tpu_custom_call.1} parent=1 // loop_header_branch
      %26 = sbr.rel (%p24) target = $region8
    $region5: #{tpu_custom_call.1} parent=1 // loop_body
      %s28 = ssub.s32 %s23, 1
      %s29 = ssub.s32 %s23, 2
      %s30 = sadd.s32 %s23, 1
      %s31 = ssub.s32 %s23, %s30
      %p32 = scmp.eq.s32.totalorder %s31, 0
      %s34 = sadd.s32 %s33, 1
      %s35 = scalar_select %p32, %s33, %s34
      %p38 = pneg %p32
      %p39 = scmp.eq.s32.totalorder %s23, 7
      %p40 = por %p38, %p39
      %p41 = scmp.ne.s32.totalorder %s33, %s36
      %p42 = scmp.eq.s32.totalorder %s23, 0
      %p43 = por %p41, %p42
      %p44 = scmp.ne.s32.totalorder %s33, %s36
      %p45 = scmp.eq.s32.totalorder %s28, 7
      %p46 = por %p44, %p45
      %p47 = scmp.ne.s32.totalorder %s36, %s37
      %p48 = scmp.eq.s32.totalorder %s28, 0
      %p49 = por %p47, %p48
      %p50 = scmp.ne.s32.totalorder %s36, %s37
      %p51 = scmp.eq.s32.totalorder %s29, 7
      %p52 = por %p50, %p51
      %p54 = scmp.ne.s32.totalorder %s37, %s53
      %p55 = scmp.eq.s32.totalorder %s29, 0
      %p56 = por %p54, %p55
      %s58 = sadd.s32 %s57, 1
      %p61 = scmp.eq.s32.totalorder %s23, 7
      %p62 = scmp.ne.s32.totalorder %s57, %s59
      %p63 = scmp.eq.s32.totalorder %s23, 0
      %p64 = por %p62, %p63
      %p65 = scmp.ne.s32.totalorder %s57, %s59
      %p66 = scmp.eq.s32.totalorder %s28, 7
      %p67 = por %p65, %p66
      %p68 = scmp.ne.s32.totalorder %s59, %s60
      %p69 = scmp.eq.s32.totalorder %s28, 0
      %p70 = por %p68, %p69
      %p71 = scmp.ne.s32.totalorder %s59, %s60
      %p72 = scmp.eq.s32.totalorder %s29, 7
      %p73 = por %p71, %p72
      %p75 = scmp.ne.s32.totalorder %s60, %s74
      %p76 = scmp.eq.s32.totalorder %s29, 0
      %p77 = por %p75, %p76
      %s79 = sadd.s32 %s78, 1
      %p82 = scmp.eq.s32.totalorder %s23, 7
      %p83 = scmp.ne.s32.totalorder %s78, %s80
      %p84 = scmp.eq.s32.totalorder %s23, 0
      %p85 = por %p83, %p84
      %p86 = scmp.ne.s32.totalorder %s78, %s80
      %p87 = scmp.eq.s32.totalorder %s28, 7
      %p88 = por %p86, %p87
      %p89 = scmp.ne.s32.totalorder %s80, %s81
      %p90 = scmp.eq.s32.totalorder %s28, 0
      %p91 = por %p89, %p90
      %p92 = scmp.ne.s32.totalorder %s80, %s81
      %p93 = scmp.eq.s32.totalorder %s29, 7
      %p94 = por %p92, %p93
      %p96 = scmp.ne.s32.totalorder %s81, %s95
      %p97 = scmp.eq.s32.totalorder %s29, 0
      %p98 = por %p96, %p97
      %s100 = sadd.s32 %s99, 1
      %p103 = scmp.eq.s32.totalorder %s23, 7
      %p104 = scmp.ne.s32.totalorder %s99, %s101
      %p105 = scmp.eq.s32.totalorder %s23, 0
      %p106 = por %p104, %p105
      %p107 = scmp.ne.s32.totalorder %s99, %s101
      %p108 = scmp.eq.s32.totalorder %s28, 7
      %p109 = por %p107, %p108
      %p110 = scmp.ne.s32.totalorder %s101, %s102
      %p111 = scmp.eq.s32.totalorder %s28, 0
      %p112 = por %p110, %p111
      %p113 = scmp.ne.s32.totalorder %s101, %s102
      %p114 = scmp.eq.s32.totalorder %s29, 7
      %p115 = por %p113, %p114
      %p117 = scmp.ne.s32.totalorder %s102, %s116
      %p118 = scmp.eq.s32.totalorder %s29, 0
      %p119 = por %p117, %p118
      %s121 = sadd.s32 %s120, 1
      %p124 = scmp.eq.s32.totalorder %s23, 7
      %p125 = scmp.ne.s32.totalorder %s120, %s122
      %p126 = scmp.eq.s32.totalorder %s23, 0
      %p127 = por %p125, %p126
      %p128 = scmp.ne.s32.totalorder %s120, %s122
      %p129 = scmp.eq.s32.totalorder %s28, 7
      %p130 = por %p128, %p129
      %p131 = scmp.ne.s32.totalorder %s122, %s123
      %p132 = scmp.eq.s32.totalorder %s28, 0
      %p133 = por %p131, %p132
      %p134 = scmp.ne.s32.totalorder %s122, %s123
      %p135 = scmp.eq.s32.totalorder %s29, 7
      %p136 = por %p134, %p135
      %p138 = scmp.ne.s32.totalorder %s123, %s137
      %p139 = scmp.eq.s32.totalorder %s29, 0
      %p140 = por %p138, %p139
      %s142 = sadd.s32 %s141, 1
      %p145 = scmp.eq.s32.totalorder %s23, 7
      %p146 = scmp.ne.s32.totalorder %s141, %s143
      %p147 = scmp.eq.s32.totalorder %s23, 0
      %p148 = por %p146, %p147
      %p149 = scmp.ne.s32.totalorder %s141, %s143
      %p150 = scmp.eq.s32.totalorder %s28, 7
      %p151 = por %p149, %p150
      %p152 = scmp.ne.s32.totalorder %s143, %s144
      %p153 = scmp.eq.s32.totalorder %s28, 0
      %p154 = por %p152, %p153
      %p155 = scmp.ne.s32.totalorder %s143, %s144
      %p156 = scmp.eq.s32.totalorder %s29, 7
      %p157 = por %p155, %p156
      %p159 = scmp.ne.s32.totalorder %s144, %s158
      %p160 = scmp.eq.s32.totalorder %s29, 0
      %p161 = por %p159, %p160
      %s163 = sadd.s32 %s162, 1
      %p166 = scmp.eq.s32.totalorder %s23, 7
      %p167 = scmp.ne.s32.totalorder %s162, %s164
      %p168 = scmp.eq.s32.totalorder %s23, 0
      %p169 = por %p167, %p168
      %p170 = scmp.ne.s32.totalorder %s162, %s164
      %p171 = scmp.eq.s32.totalorder %s28, 7
      %p172 = por %p170, %p171
      %p173 = scmp.ne.s32.totalorder %s164, %s165
      %p174 = scmp.eq.s32.totalorder %s28, 0
      %p175 = por %p173, %p174
      %p176 = scmp.ne.s32.totalorder %s164, %s165
      %p177 = scmp.eq.s32.totalorder %s29, 7
      %p178 = por %p176, %p177
      %p180 = scmp.ne.s32.totalorder %s165, %s179
      %p181 = scmp.eq.s32.totalorder %s29, 0
      %p182 = por %p180, %p181
      %s183 = ssub.s32 %s23, %s30
      %p184 = scmp.eq.s32.totalorder %s183, 0
      %s186 = sadd.s32 %s185, 1
      %s187 = scalar_select %p184, %s185, %s186
      %p190 = pneg %p184
      %p191 = scmp.eq.s32.totalorder %s23, 7
      %p192 = por %p190, %p191
      %p193 = scmp.ne.s32.totalorder %s185, %s188
      %p194 = scmp.eq.s32.totalorder %s23, 0
      %p195 = por %p193, %p194
      %p196 = scmp.ne.s32.totalorder %s185, %s188
      %p197 = scmp.eq.s32.totalorder %s28, 7
      %p198 = por %p196, %p197
      %p199 = scmp.ne.s32.totalorder %s188, %s189
      %p200 = scmp.eq.s32.totalorder %s28, 0
      %p201 = por %p199, %p200
      %p202 = scmp.ne.s32.totalorder %s188, %s189
      %p203 = scmp.eq.s32.totalorder %s29, 7
      %p204 = por %p202, %p203
      %p206 = scmp.ne.s32.totalorder %s189, %s205
      %p207 = scmp.eq.s32.totalorder %s29, 0
      %p208 = por %p206, %p207
      %s210 = sadd.s32 %s209, 1
      %p213 = scmp.eq.s32.totalorder %s23, 7
      %p214 = scmp.ne.s32.totalorder %s209, %s211
      %p215 = scmp.eq.s32.totalorder %s23, 0
      %p216 = por %p214, %p215
      %p217 = scmp.ne.s32.totalorder %s209, %s211
      %p218 = scmp.eq.s32.totalorder %s28, 7
      %p219 = por %p217, %p218
      %p220 = scmp.ne.s32.totalorder %s211, %s212
      %p221 = scmp.eq.s32.totalorder %s28, 0
      %p222 = por %p220, %p221
      %p223 = scmp.ne.s32.totalorder %s211, %s212
      %p224 = scmp.eq.s32.totalorder %s29, 7
      %p225 = por %p223, %p224
      %p227 = scmp.ne.s32.totalorder %s212, %s226
      %p228 = scmp.eq.s32.totalorder %s29, 0
      %p229 = por %p227, %p228
      %p230 = scmp.le.s32.totalorder 1, %s23
      %p231 = scmp.lt.s32.totalorder %s23, 9
      %p232 = pnand %p230, %p231
      %p233 = pneg %p232
      // Predicated region
      $region9: #{tpu_custom_call.1} parent=5 // pred_check
        _
      $region10: #{tpu_custom_call.1} parent=5 // pred_check_branch
        %235 = sbr.rel (%p232) target = $region12
      $region11: #{tpu_custom_call.1} parent=5 // pred_region
        %s236 = ssub.s32 %s23, 1
        // Predicated region
        $region13: #{tpu_custom_call.1} parent=11 // pred_check
          %p237 = pneg %p70
        $region14: #{tpu_custom_call.1} parent=11 // pred_check_branch
          %239 = sbr.rel (%p237) target = $region16
        $region15: #{tpu_custom_call.1} parent=11 // pred_region
          %s241 = ssub.s32 128, 128
          %242 = vsyncadd [#allocation6], %s241
          %s244 = sshll.u32 [#allocation5], 4
          %s245 = int_to_ptr.vmem [resolvable:$true] %s244
          %247 = dma.hbm_to_vmem [thread:$0]  %s1, 128, %s245, [#allocation6]
        $region16: #{tpu_custom_call.1} parent=11 // pred_fallthru
          _
        // Predicated region
        $region17: #{tpu_custom_call.1} parent=11 // pred_check
          %p248 = pneg %p91
        $region18: #{tpu_custom_call.1} parent=11 // pred_check_branch
          %250 = sbr.rel (%p248) target = $region20
        $region19: #{tpu_custom_call.1} parent=11 // pred_region
          _
        $region20: #{tpu_custom_call.1} parent=11 // pred_fallthru
          _
        // Predicated region
        $region21: #{tpu_custom_call.1} parent=11 // pred_check
          %p251 = pneg %p112
        $region22: #{tpu_custom_call.1} parent=11 // pred_check_branch
          %253 = sbr.rel (%p251) target = $region24
        $region23: #{tpu_custom_call.1} parent=11 // pred_region
          _
        $region24: #{tpu_custom_call.1} parent=11 // pred_fallthru
          _
        // Predicated region
        $region25: #{tpu_custom_call.1} parent=11 // pred_check
          %p254 = pneg %p133
        $region26: #{tpu_custom_call.1} parent=11 // pred_check_branch
          %256 = sbr.rel (%p254) target = $region28
        $region27: #{tpu_custom_call.1} parent=11 // pred_region
          _
        $region28: #{tpu_custom_call.1} parent=11 // pred_fallthru
          _
        // Predicated region
        $region29: #{tpu_custom_call.1} parent=11 // pred_check
          %p257 = pneg %p154
        $region30: #{tpu_custom_call.1} parent=11 // pred_check_branch
          %259 = sbr.rel (%p257) target = $region32
        $region31: #{tpu_custom_call.1} parent=11 // pred_region
          _
        $region32: #{tpu_custom_call.1} parent=11 // pred_fallthru
          _
        // Predicated region
        $region33: #{tpu_custom_call.1} parent=11 // pred_check
          %p260 = pneg %p175
        $region34: #{tpu_custom_call.1} parent=11 // pred_check_branch
          %262 = sbr.rel (%p260) target = $region36
        $region35: #{tpu_custom_call.1} parent=11 // pred_region
          _
        $region36: #{tpu_custom_call.1} parent=11 // pred_fallthru
          _
      $region12: #{tpu_custom_call.1} parent=5 // pred_fallthru
        _
      %p263 = scmp.lt.s32.totalorder %s23, 8
      // Predicated region
      $region37: #{tpu_custom_call.1} parent=5 // pred_check
        %p264 = pneg %p263
      $region38: #{tpu_custom_call.1} parent=5 // pred_check_branch
        %266 = sbr.rel (%p264) target = $region40
      $region39: #{tpu_custom_call.1} parent=5 // pred_region
        // Predicated region
        $region41: #{tpu_custom_call.1} parent=39 // pred_check
          %p267 = pneg %p43
        $region42: #{tpu_custom_call.1} parent=39 // pred_check_branch
          %269 = sbr.rel (%p267) target = $region44
        $region43: #{tpu_custom_call.1} parent=39 // pred_region
          %s270 = sand.u32 %s33, 1
          %s271 = scalar_lea.sflag [#allocation3], %s270
          %s272 = sand.u32 %s33, 1
          %s273 = smul.addr %s272, 8
          %s274 = scalar_lea.vmem [#allocation2], %s273
          %s276 = ssub.s32 128, 128
          %277 = vsyncadd %s271, %s276
          %s278 = smul.addr %s23, 128
          %s279 = scalar_lea.hbm %s0, %s278
          %s281 = sshll.u32 %s274, 4
          %s282 = int_to_ptr.vmem [resolvable:$true] %s281
          %284 = dma.hbm_to_vmem [thread:$0]  %s279, 128, %s282, %s271
        $region44: #{tpu_custom_call.1} parent=39 // pred_fallthru
          _
      $region40: #{tpu_custom_call.1} parent=5 // pred_fallthru
        _
      %p285 = scmp.le.s32.totalorder 1, %s23
      %p286 = scmp.lt.s32.totalorder %s23, 9
      %p287 = pnand %p285, %p286
      %p288 = pneg %p287
      // Predicated region
      $region45: #{tpu_custom_call.1} parent=5 // pred_check
        _
      $region46: #{tpu_custom_call.1} parent=5 // pred_check_branch
        %290 = sbr.rel (%p287) target = $region48
      $region47: #{tpu_custom_call.1} parent=5 // pred_region
        %s291 = ssub.s32 %s23, 1
        %s292 = sand.u32 %s36, 1
        %s293 = scalar_lea.sflag [#allocation3], %s292
        %s294 = sand.u32 %s36, 1
        %s295 = smul.addr %s294, 8
        %s296 = scalar_lea.vmem [#allocation2], %s295
        // Predicated region
        $region49: #{tpu_custom_call.1} parent=47 // pred_check
          %p297 = pneg %p49
        $region50: #{tpu_custom_call.1} parent=47 // pred_check_branch
          %299 = sbr.rel (%p297) target = $region52
        $region51: #{tpu_custom_call.1} parent=47 // pred_region
          %300 = dma.done %s293, 128
        $region52: #{tpu_custom_call.1} parent=47 // pred_fallthru
          _
        // Predicated region
        $region53: #{tpu_custom_call.1} parent=47 // pred_check
          %p301 = pneg %p70
        $region54: #{tpu_custom_call.1} parent=47 // pred_check_branch
          %303 = sbr.rel (%p301) target = $region56
        $region55: #{tpu_custom_call.1} parent=47 // pred_region
          %304 = dma.done [#allocation6], 128
        $region56: #{tpu_custom_call.1} parent=47 // pred_fallthru
          _
        %s305 = sand.u32 %s36, 1
        %s306 = scalar_lea.sflag [#allocation3], %s305
        %s307 = sand.u32 %s36, 1
        %s308 = smul.addr %s307, 8
        %s309 = scalar_lea.vmem [#allocation2], %s308
        %p310 = pneg %p49
        %p311 = pneg %p46
        %p312 = pneg %p70
        %p313 = pneg %p67
        %p314 = pneg %p91
        %p315 = pneg %p88
        %p316 = pneg %p112
        %p317 = pneg %p109
        %p318 = pneg %p133
        %p319 = pneg %p130
        %p320 = pneg %p154
        %p321 = pneg %p151
        %p322 = pneg %p175
        %p323 = pneg %p172
        %p324 = pneg %p201
        %p325 = pneg %p198
        %s326 = sand.u32 %s188, 1
        %s327 = scalar_lea.sflag [#allocation4], %s326
        %s328 = sand.u32 %s188, 1
        %s329 = smul.addr %s328, 8
        %s330 = scalar_lea.vmem [#allocation7], %s329
        %p331 = pneg %p222
        %p332 = pneg %p219
        %p333 = scmp.eq.s32.totalorder %s28, 0
        // Predicated region
        $region57: #{tpu_custom_call.1} parent=47 // pred_check
          %p334 = pneg %p333
        $region58: #{tpu_custom_call.1} parent=47 // pred_check_branch
          %336 = sbr.rel (%p334) target = $region60
        $region59: #{tpu_custom_call.1} parent=47 // pred_region
          %v337 = vld [vmem:[#allocation5] sm:$0xff]
          %vm338 = vcmask 261120
          %339 = vst.msk [vmem:[#allocation8] sm:$0xff] %vm338, %v337
        $region60: #{tpu_custom_call.1} parent=47 // pred_fallthru
          _
        %v340 = vld [vmem:[%s296] sm:$0xff]
        %v341 = vld [vmem:[#allocation8] sm:$0xff]
        %v342 = vld [vmem:[%s2] sm:$0xff]
        %v343 = vld [vmem:[%s2 + $0x8] sm:$0xff]
        %v344 = vld [vmem:[%s3] sm:$0xff]
        %v345 = vld [vmem:[%s3 + $0x8] sm:$0xff]
        %v346 = vld [vmem:[%s3 + $0x10] sm:$0xff]
        %v347 = vld [vmem:[%s3 + $0x18] sm:$0xff]
        %vm348 = vcmask 261120
        %v350 = vsel %vm348, %v341, 0
        %352 = vmatprep.subr.mxu0 0.0
        %353 = vmatpush1.msra.mxu0 %v344
        %354 = vmatprep.subr.mxu0 0.0
        %355 = vmatpush1.msra.mxu0 %v345
        %356 = vmatprep.subr.mxu0 0.0
        %357 = vmatpush1.msra.mxu0 %v346
        %358 = vmatprep.subr.mxu0 0.0
        %359 = vmatpush1.msra.mxu0 %v347
        %360 = vmatprep.subr.mxu0 0.0
        %361 = vmatpush1.msra.mxu0 0.0
        %362 = vmatprep.subr.mxu0 0.0
        %363 = vmatpush1.msra.mxu0 0.0
        %364 = vmatprep.subr.mxu0 0.0
        %365 = vmatpush1.msra.mxu0 0.0
        %366 = vmatprep.subr.mxu0 0.0
        %367 = vmatpush1.msra.mxu0 0.0
        %368 = vmatprep.subr.mxu0 0.0
        %369 = vmatpush1.msra.mxu0 0.0
        %370 = vmatprep.subr.mxu0 0.0
        %371 = vmatpush1.msra.mxu0 0.0
        %372 = vmatprep.subr.mxu0 0.0
        %373 = vmatpush1.msra.mxu0 0.0
        %374 = vmatprep.subr.mxu0 0.0
        %375 = vmatpush1.msra.mxu0 0.0
        %376 = vmatprep.subr.mxu0 0.0
        %377 = vmatpush1.msra.mxu0 0.0
        %378 = vmatprep.subr.mxu0 0.0
        %379 = vmatpush1.msra.mxu0 0.0
        %380 = vmatprep.subr.mxu0 0.0
        %381 = vmatpush1.msra.mxu0 0.0
        %382 = vmatprep.subr.mxu0 0.0
        %383 = vmatpush1.msra.mxu0 0.0
        %384 = vmatprep.subr.mxu0 0.0
        %385 = vmatpush1.msra.mxu0 0.0
        %386 = vmatprep.subr.mxu0 0.0
        %387 = vmatpush1.msra.mxu0 0.0
        %388 = vmatprep.subr.mxu0 0.0
        %389 = vmatpush1.msra.mxu0 0.0
        %390 = vmatprep.subr.mxu0 0.0
        %391 = vmatpush1.msra.mxu0 0.0
        %392 = vmatprep.subr.mxu0 0.0
        %393 = vmatpush1.msra.mxu0 0.0
        %394 = vmatprep.subr.mxu0 0.0
        %395 = vmatpush1.msra.mxu0 0.0
        %396 = vmatprep.subr.mxu0 0.0
        %397 = vmatpush1.msra.mxu0 0.0
        %398 = vmatprep.subr.mxu0 0.0
        %399 = vmatpush1.msra.mxu0 0.0
        %400 = vmatprep.subr.mxu0 0.0
        %401 = vmatpush1.msra.mxu0 0.0
        %402 = vmatprep.subr.mxu0 0.0
        %403 = vmatpush1.msra.mxu0 0.0
        %404 = vmatprep.subr.mxu0 0.0
        %405 = vmatpush1.msra.mxu0 0.0
        %406 = vmatprep.subr.mxu0 0.0
        %407 = vmatpush1.msra.mxu0 0.0
        %408 = vmatprep.subr.mxu0 0.0
        %409 = vmatpush1.msra.mxu0 0.0
        %410 = vmatprep.subr.mxu0 0.0
        %411 = vmatpush1.msra.mxu0 0.0
        %412 = vmatprep.subr.mxu0 0.0
        %413 = vmatpush1.msra.mxu0 0.0
        %414 = vmatprep.subr.mxu0 0.0
        %415 = vmatpush1.msra.mxu0 0.0
        %416 = vmatprep.mubr.f32.mxu0 0.0
        %417 = vmatmul.mubr.f32.gmra.mrb[0].mxu0 %v350
        %v418 = vpop.f32.mrb[0].mxu0
        %v419 = vadd.f32 0.0, %v418
        %v420 = vpop.f32.mrb[0].mxu0
        %421 = vdwg.mxu0
        %vm422 = vcmask 130048
        %v424 = vsel %vm422, %v340, 0
        %426 = vmatprep.subr.mxu0 0.0
        %427 = vmatpush1.msra.mxu0 %v342
        %428 = vmatprep.subr.mxu0 0.0
        %429 = vmatpush1.msra.mxu0 %v343
        %430 = vmatprep.subr.mxu0 0.0
        %431 = vmatpush1.msra.mxu0 0.0
        %432 = vmatprep.subr.mxu0 0.0
        %433 = vmatpush1.msra.mxu0 0.0
        %434 = vmatprep.subr.mxu0 0.0
        %435 = vmatpush1.msra.mxu0 0.0
        %436 = vmatprep.subr.mxu0 0.0
        %437 = vmatpush1.msra.mxu0 0.0
        %438 = vmatprep.subr.mxu0 0.0
        %439 = vmatpush1.msra.mxu0 0.0
        %440 = vmatprep.subr.mxu0 0.0
        %441 = vmatpush1.msra.mxu0 0.0
        %442 = vmatprep.subr.mxu0 0.0
        %443 = vmatpush1.msra.mxu0 0.0
        %444 = vmatprep.subr.mxu0 0.0
        %445 = vmatpush1.msra.mxu0 0.0
        %446 = vmatprep.subr.mxu0 0.0
        %447 = vmatpush1.msra.mxu0 0.0
        %448 = vmatprep.subr.mxu0 0.0
        %449 = vmatpush1.msra.mxu0 0.0
        %450 = vmatprep.subr.mxu0 0.0
        %451 = vmatpush1.msra.mxu0 0.0
        %452 = vmatprep.subr.mxu0 0.0
        %453 = vmatpush1.msra.mxu0 0.0
        %454 = vmatprep.subr.mxu0 0.0
        %455 = vmatpush1.msra.mxu0 0.0
        %456 = vmatprep.subr.mxu0 0.0
        %457 = vmatpush1.msra.mxu0 0.0
        %458 = vmatprep.subr.mxu0 0.0
        %459 = vmatpush1.msra.mxu0 0.0
        %460 = vmatprep.subr.mxu0 0.0
        %461 = vmatpush1.msra.mxu0 0.0
        %462 = vmatprep.subr.mxu0 0.0
        %463 = vmatpush1.msra.mxu0 0.0
        %464 = vmatprep.subr.mxu0 0.0
        %465 = vmatpush1.msra.mxu0 0.0
        %466 = vmatprep.subr.mxu0 0.0
        %467 = vmatpush1.msra.mxu0 0.0
        %468 = vmatprep.subr.mxu0 0.0
        %469 = vmatpush1.msra.mxu0 0.0
        %470 = vmatprep.subr.mxu0 0.0
        %471 = vmatpush1.msra.mxu0 0.0
        %472 = vmatprep.subr.mxu0 0.0
        %473 = vmatpush1.msra.mxu0 0.0
        %474 = vmatprep.subr.mxu0 0.0
        %475 = vmatpush1.msra.mxu0 0.0
        %476 = vmatprep.subr.mxu0 0.0
        %477 = vmatpush1.msra.mxu0 0.0
        %478 = vmatprep.subr.mxu0 0.0
        %479 = vmatpush1.msra.mxu0 0.0
        %480 = vmatprep.subr.mxu0 0.0
        %481 = vmatpush1.msra.mxu0 0.0
        %482 = vmatprep.subr.mxu0 0.0
        %483 = vmatpush1.msra.mxu0 0.0
        %484 = vmatprep.subr.mxu0 0.0
        %485 = vmatpush1.msra.mxu0 0.0
        %486 = vmatprep.subr.mxu0 0.0
        %487 = vmatpush1.msra.mxu0 0.0
        %488 = vmatprep.subr.mxu0 0.0
        %489 = vmatpush1.msra.mxu0 0.0
        %490 = vmatprep.mubr.f32.mxu0 0.0
        %491 = vmatmul.mubr.f32.gmra.mrb[0].mxu0 %v424
        %v492 = vpop.f32.mrb[0].mxu0
        %v493 = vadd.f32 %v419, %v492
        %v494 = vpop.f32.mrb[0].mxu0
        %495 = vdwg.mxu0
        %v496 = vld [vmem:[%s4] sm:$0x1]
        %v498 = vlaneseq
        %v499 = vshrl.u32 %v498, 7
        %v500 = vsub.s32 0, %v499
        %v501 = vrot.slane %v496, %v500
        %v503 = vadd.f32 %v493, %v501
        %v504 = vld [vmem:[%s5] sm:$0xff]
        %v505 = vld [vmem:[%s5 + $0x8] sm:$0xff]
        %v506 = vld [vmem:[%s5 + $0x10] sm:$0xff]
        %v507 = vld [vmem:[%s5 + $0x18] sm:$0xff]
        %v508 = vld [vmem:[%s6] sm:$0x1]
        %v510 = vlaneseq
        %v511 = vshrl.u32 %v510, 7
        %v512 = vsub.s32 0, %v511
        %v513 = vrot.slane %v508, %v512
        %v516 = vsel %vm348, %v503, 0
        %518 = vmatprep.subr.mxu0 0.0
        %519 = vmatpush1.msra.mxu0 %v504
        %520 = vmatprep.subr.mxu0 0.0
        %521 = vmatpush1.msra.mxu0 %v505
        %522 = vmatprep.subr.mxu0 0.0
        %523 = vmatpush1.msra.mxu0 %v506
        %524 = vmatprep.subr.mxu0 0.0
        %525 = vmatpush1.msra.mxu0 %v507
        %526 = vmatprep.subr.mxu0 0.0
        %527 = vmatpush1.msra.mxu0 0.0
        %528 = vmatprep.subr.mxu0 0.0
        %529 = vmatpush1.msra.mxu0 0.0
        %530 = vmatprep.subr.mxu0 0.0
        %531 = vmatpush1.msra.mxu0 0.0
        %532 = vmatprep.subr.mxu0 0.0
        %533 = vmatpush1.msra.mxu0 0.0
        %534 = vmatprep.subr.mxu0 0.0
        %535 = vmatpush1.msra.mxu0 0.0
        %536 = vmatprep.subr.mxu0 0.0
        %537 = vmatpush1.msra.mxu0 0.0
        %538 = vmatprep.subr.mxu0 0.0
        %539 = vmatpush1.msra.mxu0 0.0
        %540 = vmatprep.subr.mxu0 0.0
        %541 = vmatpush1.msra.mxu0 0.0
        %542 = vmatprep.subr.mxu0 0.0
        %543 = vmatpush1.msra.mxu0 0.0
        %544 = vmatprep.subr.mxu0 0.0
        %545 = vmatpush1.msra.mxu0 0.0
        %546 = vmatprep.subr.mxu0 0.0
        %547 = vmatpush1.msra.mxu0 0.0
        %548 = vmatprep.subr.mxu0 0.0
        %549 = vmatpush1.msra.mxu0 0.0
        %550 = vmatprep.subr.mxu0 0.0
        %551 = vmatpush1.msra.mxu0 0.0
        %552 = vmatprep.subr.mxu0 0.0
        %553 = vmatpush1.msra.mxu0 0.0
        %554 = vmatprep.subr.mxu0 0.0
        %555 = vmatpush1.msra.mxu0 0.0
        %556 = vmatprep.subr.mxu0 0.0
        %557 = vmatpush1.msra.mxu0 0.0
        %558 = vmatprep.subr.mxu0 0.0
        %559 = vmatpush1.msra.mxu0 0.0
        %560 = vmatprep.subr.mxu0 0.0
        %561 = vmatpush1.msra.mxu0 0.0
        %562 = vmatprep.subr.mxu0 0.0
        %563 = vmatpush1.msra.mxu0 0.0
        %564 = vmatprep.subr.mxu0 0.0
        %565 = vmatpush1.msra.mxu0 0.0
        %566 = vmatprep.subr.mxu0 0.0
        %567 = vmatpush1.msra.mxu0 0.0
        %568 = vmatprep.subr.mxu0 0.0
        %569 = vmatpush1.msra.mxu0 0.0
        %570 = vmatprep.subr.mxu0 0.0
        %571 = vmatpush1.msra.mxu0 0.0
        %572 = vmatprep.subr.mxu0 0.0
        %573 = vmatpush1.msra.mxu0 0.0
        %574 = vmatprep.subr.mxu0 0.0
        %575 = vmatpush1.msra.mxu0 0.0
        %576 = vmatprep.subr.mxu0 0.0
        %577 = vmatpush1.msra.mxu0 0.0
        %578 = vmatprep.subr.mxu0 0.0
        %579 = vmatpush1.msra.mxu0 0.0
        %580 = vmatprep.subr.mxu0 0.0
        %581 = vmatpush1.msra.mxu0 0.0
        %582 = vmatprep.mubr.f32.mxu0 0.0
        %583 = vmatmul.mubr.f32.gmra.mrb[0].mxu0 %v516
        %v584 = vpop.f32.mrb[0].mxu0
        %v585 = vadd.f32 %v513, %v584
        %v586 = vpop.f32.mrb[0].mxu0
        %587 = vdwg.mxu0
        %vm588 = vcmask 64512
        %v589 = vsel %vm588, %v585, -inf
        %590 = vmax.xlane.f32.xlu0 %v589
        %v591 = vpop.xlane.xlu0 %590
        %v592 = vsub.f32 %v585, %v591
        %v593 = vmul.f32 %v592, 1.442695
        %v594 = vpow.pop %v593
        %v595 = vsel %vm588, %v594, 0.0
        %596 = vadd.xlane.f32.xlu0 %v595
        %v597 = vpop.xlane.xlu0 %596
        %v598 = vlog2.pop %v597
        %v599 = vmul.f32 %v598, 0.6931472
        %v600 = vsub.f32 %v592, %v599
        %601 = vst.msk [vmem:[%s330] sm:$0xff] %vm588, %v600
        %602 = vst.msk [vmem:[#allocation8] sm:$0xff] %vm348, %v503
        %s603 = sand.u32 %s188, 1
        %s604 = scalar_lea.sflag [#allocation4], %s603
        %s605 = sand.u32 %s188, 1
        %s606 = smul.addr %s605, 8
        %s607 = scalar_lea.vmem [#allocation7], %s606
        // Predicated region
        $region61: #{tpu_custom_call.1} parent=47 // pred_check
          %p608 = pneg %p198
        $region62: #{tpu_custom_call.1} parent=47 // pred_check_branch
          %610 = sbr.rel (%p608) target = $region64
        $region63: #{tpu_custom_call.1} parent=47 // pred_region
          %s612 = ssub.s32 128, 128
          %613 = vsyncadd %s604, %s612
          %s614 = smul.addr %s28, 128
          %s615 = scalar_lea.hbm %s7, %s614
          %s617 = sshll.u32 %s607, 4
          %s618 = int_to_ptr.vmem [resolvable:$true] %s617
          %620 = dma.vmem_to_hbm [thread:$0]  %s618, 128, %s615, %s604
        $region64: #{tpu_custom_call.1} parent=47 // pred_fallthru
          _
        // Predicated region
        $region65: #{tpu_custom_call.1} parent=47 // pred_check
          %p621 = pneg %p219
        $region66: #{tpu_custom_call.1} parent=47 // pred_check_branch
          %623 = sbr.rel (%p621) target = $region68
        $region67: #{tpu_custom_call.1} parent=47 // pred_region
          %s625 = ssub.s32 128, 128
          %626 = vsyncadd [#allocation9], %s625
          %s628 = sshll.u32 [#allocation8], 4
          %s629 = int_to_ptr.vmem [resolvable:$true] %s628
          %631 = dma.vmem_to_hbm [thread:$0]  %s629, 128, %s8, [#allocation9]
        $region68: #{tpu_custom_call.1} parent=47 // pred_fallthru
          _
        // Predicated region
        $region69: #{tpu_custom_call.1} parent=47 // pred_check
          %p632 = pneg %p219
        $region70: #{tpu_custom_call.1} parent=47 // pred_check_branch
          %634 = sbr.rel (%p632) target = $region72
        $region71: #{tpu_custom_call.1} parent=47 // pred_region
          %635 = dma.done [#allocation9], 128
        $region72: #{tpu_custom_call.1} parent=47 // pred_fallthru
          _
      $region48: #{tpu_custom_call.1} parent=5 // pred_fallthru
        _
      %p636 = scmp.le.s32.totalorder 2, %s23
      // Predicated region
      $region73: #{tpu_custom_call.1} parent=5 // pred_check
        %p637 = pneg %p636
      $region74: #{tpu_custom_call.1} parent=5 // pred_check_branch
        %639 = sbr.rel (%p637) target = $region76
      $region75: #{tpu_custom_call.1} parent=5 // pred_region
        %s640 = ssub.s32 %s23, 2
        // Predicated region
        $region77: #{tpu_custom_call.1} parent=75 // pred_check
          %p641 = pneg %p204
        $region78: #{tpu_custom_call.1} parent=75 // pred_check_branch
          %643 = sbr.rel (%p641) target = $region80
        $region79: #{tpu_custom_call.1} parent=75 // pred_region
          %s644 = sand.u32 %s189, 1
          %s645 = scalar_lea.sflag [#allocation4], %s644
          %s646 = sand.u32 %s189, 1
          %s647 = smul.addr %s646, 8
          %s648 = scalar_lea.vmem [#allocation7], %s647
          %649 = dma.done %s645, 128
        $region80: #{tpu_custom_call.1} parent=75 // pred_fallthru
          _
      $region76: #{tpu_custom_call.1} parent=5 // pred_fallthru
        _
    $region6: #{tpu_custom_call.1} parent=1 // loop_footer
      %s27 = sadd.s32 1, %s23
    $region7: #{tpu_custom_call.1} parent=1 // loop_footer_branch
      %22 = sbr.rel target = $region3
    $region8: #{tpu_custom_call.1} parent=1 // loop_exit
      _
    %650 = vsyncpa [#allocation3], 1
    %s651 = scalar_lea.sflag [#allocation3], 1
    %652 = vsyncpa %s651, 1
    %653 = vsyncpa [#allocation6], 1
    %654 = vsyncpa [#allocation4], 1
    %s655 = scalar_lea.sflag [#allocation4], 1
    %656 = vsyncpa %s655, 1
    %657 = vsyncpa [#allocation9], 1

</llo_original>
